<compile_context>
chip_gen: v6e
topology: v6e:2x2x1
jax: 0.10.0
libtpu: 0.0.40
codegen_flags: <defaults>
</compile_context>

<pallas_src>
import jax
import jax.numpy as jnp
from jax import lax
from jax.experimental import pallas as pl
from jax.experimental.pallas import tpu as pltpu


def _round_up(x, m):
    return (x + m - 1) // m * m


# ---------------------------------------------------------------------------
# Pass 1: spatial mean pooling.  x (B_pad, C, HW) f32 -> pooled (B_pad, C) f32.
# ---------------------------------------------------------------------------
def _pool_kernel(x_ref, o_ref):
    # x_ref: (TBp, C, HW) f32 ; o_ref: (TBp, C) f32
    o_ref[...] = jnp.mean(x_ref[...], axis=-1)


def _pool(x, tbp):
    B_pad, C, HW = x.shape
    grid = (B_pad // tbp,)

    # Actual VMEM tiles (lane dim padded to 128), double-buffered.
    vmem = 2 * tbp * C * _round_up(HW, 128) * 4 + 2 * tbp * _round_up(C, 128) * 4
    vmem = min(max(2 * vmem, 4 << 20), 56 << 20)

    cost = pl.CostEstimate(
        flops=B_pad * C * HW,
        transcendentals=0,
        bytes_accessed=x.size * 4 + B_pad * C * 4,
    )

    return pl.pallas_call(
        _pool_kernel,
        out_shape=jax.ShapeDtypeStruct((B_pad, C), jnp.float32),
        grid_spec=pltpu.PrefetchScalarGridSpec(
            num_scalar_prefetch=0,
            grid=grid,
            in_specs=[pl.BlockSpec((tbp, C, HW), lambda i: (i, 0, 0))],
            out_specs=pl.BlockSpec((tbp, C), lambda i: (i, 0)),
        ),
        compiler_params=pltpu.CompilerParams(
            dimension_semantics=("parallel",),
            vmem_limit_bytes=vmem,
        ),
        cost_estimate=cost,
    )(x)


# ---------------------------------------------------------------------------
# Pass 2: logits = pooled @ W^T + b   (weight streamed once over the V grid).
# ---------------------------------------------------------------------------
def _logits_kernel(pooled_ref, w_ref, b_ref, o_ref):
    # pooled_ref: (TB, C) f32   ; w_ref: (TV, C) compute_dtype (PyTorch layout)
    # b_ref:      (1, TV) f32   ; o_ref: (TB, TV) f32
    # Cast the tiny pooled operand to the weight dtype at the MXU only; the
    # pooled values themselves stay f32 in HBM/VMEM.  f32 accumulation.
    p = pooled_ref[...].astype(w_ref.dtype)
    logits = lax.dot_general(
        p, w_ref[...],
        dimension_numbers=(((1,), (1,)), ((), ())),
        preferred_element_type=jnp.float32)
    o_ref[...] = logits + b_ref[...]


def linear_textual_head(visual_features, weight, bias, *,
                        compute_dtype=jnp.bfloat16, tile_v=None):
    """Forward of LinearTextualHead.

    visual_features: (B, C, H, W) float32 (NCHW)
    weight:          (V, C) float32  (nn.Linear weight layout)
    bias:            (V,)   float32
    Returns logits (B, V) float32.
    """
    B, C, H, W = visual_features.shape
    V = weight.shape[0]
    HW = H * W

    # NCHW -> (B, C, HW): pure reshape, no transpose / HBM layout round-trip.
    x = visual_features.reshape(B, C, HW).astype(jnp.float32)

    # Batch padding / tiling: sublane multiple; tiles up to 256 fill the
    # v6e/v7x 256-wide MXU (v5e's 128-wide MXU is still fed fine).
    B_pad8 = _round_up(B, 8)
    TB = min(B_pad8, 256)
    B_pad = _round_up(B_pad8, TB)
    if B_pad != B:
        x = jnp.pad(x, ((0, B_pad - B), (0, 0), (0, 0)))

    # --- Pass 1: pooling pre-pass (x streamed from HBM exactly once). ---
    # TBp = 8 divides any B_pad; the (8, C, HW) block is ~8 MiB even at the
    # production sizes (C=2048, HW=49 lane-padded to 128).
    TBp = 8
    pooled = _pool(x, TBp)                      # (B_pad, C) f32

    # --- Pass 2: vocab projection. ---
    if tile_v is None:
        tile_v = min(2048, _round_up(V, 128))
    TV = _round_up(tile_v, 128)
    V_pad = _round_up(V, TV)

    # Keep PyTorch (V, C) layout; stream the weight in `compute_dtype`.
    w = weight.astype(compute_dtype)
    b = bias.astype(jnp.float32).reshape(1, V)
    if V_pad != V:
        w = jnp.pad(w, ((0, V_pad - V), (0, 0)))
        b = jnp.pad(b, ((0, 0), (0, V_pad - V)))

    n_vt = V_pad // TV
    n_bt = B_pad // TB
    # Weight index depends only on the OUTER axis; batch is inner, so the
    # (V, C) weight is DMA'd once total (not once per batch tile).
    grid = (n_vt, n_bt)

    # VMEM budget from the actual double-buffered tiles (lane dims padded),
    # capped below v7x's 64 MiB physical VMEM.
    C_lane = _round_up(C, 128)
    w_itemsize = jnp.dtype(compute_dtype).itemsize
    vmem = (2 * TV * C_lane * w_itemsize      # weight tiles
            + 2 * TB * C_lane * 4             # pooled tiles
            + 2 * TB * TV * 4                 # output tiles
            + 2 * 8 * TV * 4)                 # bias tiles (sublane-padded)
    vmem = min(max(int(vmem * 1.5), 4 << 20), 56 << 20)

    cost = pl.CostEstimate(
        flops=2 * B_pad * C * V_pad,
        transcendentals=0,
        bytes_accessed=(w.size * w_itemsize           # weight read exactly once
                        + pooled.size * 4 * n_vt      # pooled re-read per V tile
                        + b.size * 4
                        + B_pad * V_pad * 4),
    )

    out = pl.pallas_call(
        _logits_kernel,
        out_shape=jax.ShapeDtypeStruct((B_pad, V_pad), jnp.float32),
        grid_spec=pltpu.PrefetchScalarGridSpec(
            num_scalar_prefetch=0,
            grid=grid,
            in_specs=[
                # pooled: varies only with the inner batch axis (tiny DMA).
                pl.BlockSpec((TB, C), lambda j, i: (i, 0)),
                # weight: constant along the inner axis -> streamed once.
                pl.BlockSpec((TV, C), lambda j, i: (j, 0)),
                pl.BlockSpec((1, TV), lambda j, i: (0, j)),
            ],
            out_specs=pl.BlockSpec((TB, TV), lambda j, i: (i, j)),
        ),
        compiler_params=pltpu.CompilerParams(
            # Both axes independent; on v7x the vocab axis can be split across
            # the two TensorCores (each streams half the weight).
            dimension_semantics=("parallel", "parallel"),
            vmem_limit_bytes=vmem,
        ),
        cost_estimate=cost,
    )(pooled, w, b)

    return out[:B, :V]


def init_params(key, visual_feature_size, vocab_size):
    """nn.Linear default init: uniform(-1/sqrt(C), 1/sqrt(C))."""
    kw, kb = jax.random.split(key)
    bound = 1.0 / jnp.sqrt(jnp.float32(visual_feature_size))
    weight = jax.random.uniform(
        kw, (vocab_size, visual_feature_size), jnp.float32, -bound, bound)
    bias = jax.random.uniform(kb, (vocab_size,), jnp.float32, -bound, bound)
    return weight, bias


if __name__ == "__main__":
    key = jax.random.PRNGKey(0)
    k_x, k_p = jax.random.split(key)

    B, C, H, W = 2, 4, 16, 16        # visual_feature_size = C = 4
    vocab_size = 384                 # small, but enough for a multi-tile V grid

    visual_features = jax.random.normal(k_x, (B, C, H, W), jnp.float32)
    weight, bias = init_params(k_p, C, vocab_size)

    # Reference: exact math of the PyTorch module (view -> permute -> mean -> linear).
    pooled_ref = visual_features.reshape(B, C, H * W).transpose(0, 2, 1).mean(axis=1)
    logits_ref = pooled_ref @ weight.T + bias

    # f32 path (multi-tile V grid): must match the module to tight tolerance.
    logits_f32 = linear_textual_head(visual_features, weight, bias,
                                     compute_dtype=jnp.float32, tile_v=128)
    jax.block_until_ready(logits_f32)
    assert logits_f32.shape == (B, vocab_size)
    assert jnp.allclose(logits_f32, logits_ref, atol=1e-5, rtol=1e-5)

    # Default bf16 weight-streaming path (default tile_v): f32 accumulation,
    # loose tolerance for the bf16 cast.
    logits_bf16 = linear_textual_head(visual_features, weight, bias)
    jax.block_until_ready(logits_bf16)
    assert logits_bf16.shape == (B, vocab_size)
    assert jnp.allclose(logits_bf16, logits_ref, atol=3e-2, rtol=3e-2)

    # bf16 path with a small vocab tile (exercises the (V outer, B inner) grid).
    logits_bf16_t = linear_textual_head(visual_features, weight, bias, tile_v=128)
    jax.block_until_ready(logits_bf16_t)
    assert jnp.allclose(logits_bf16_t, logits_ref, atol=3e-2, rtol=3e-2)

    print("KERNEL_OK")
</pallas_src>

<mosaic_0001>
module attributes {stable_mosaic.version = 11 : i64} {
  func.func @_pool_kernel(%arg0: i32, %arg1: memref<8x4x256xf32, #tpu.memory_space<vmem>>, %arg2: memref<8x4xf32, #tpu.memory_space<vmem>>) attributes {dimension_semantics = [#tpu.dimension_semantics<parallel>], iteration_bounds = array<i64: 1>, scalar_prefetch = 0 : i64, scratch_operands = 0 : i64, tpu.core_type = #tpu.core_type<tc>, window_params = [{transform_indices = @transform_0, window_bounds = array<i64: 8, 4, 256>}, {transform_indices = @transform_1, window_bounds = array<i64: 8, 4>}]} {
    %c0 = arith.constant 0 : index
    %c0_0 = arith.constant 0 : index
    %c0_1 = arith.constant 0 : index
    %0 = vector.load %arg1[%c0, %c0_0, %c0_1] : memref<8x4x256xf32, #tpu.memory_space<vmem>>, vector<8x4x256xf32>
    %cst = arith.constant dense<0.000000e+00> : vector<8x4xf32>
    %1 = vector.multi_reduction <add>, %0, %cst [2] : vector<8x4x256xf32> to vector<8x4xf32>
    %cst_2 = arith.constant 2.560000e+02 : f32
    %2 = vector.broadcast %cst_2 : f32 to vector<8x4xf32>
    %3 = arith.divf %1, %2 : vector<8x4xf32>
    %c0_3 = arith.constant 0 : index
    %c0_4 = arith.constant 0 : index
    %4 = vector.load %arg2[%c0_3, %c0_4] : memref<8x4xf32, #tpu.memory_space<vmem>>, vector<8x4xf32>
    tpu.vector_store %arg2[%c0_3, %c0_4], %3 {strides = array<i32>} : memref<8x4xf32, #tpu.memory_space<vmem>>, vector<8x4xf32>,
    return
  }
  func.func @transform_0(%arg0: i32) -> (i32, i32, i32) {
    %c0_i32 = arith.constant 0 : i32
    %c0_i32_0 = arith.constant 0 : i32
    %c0_i32_1 = arith.constant 0 : i32
    return %arg0, %c0_i32, %c0_i32_0 : i32, i32, i32
  }
  func.func @transform_1(%arg0: i32) -> (i32, i32) {
    %c0_i32 = arith.constant 0 : i32
    %c0_i32_0 = arith.constant 0 : i32
    return %arg0, %c0_i32 : i32, i32
  }
}

</mosaic_0001>

<llo_original>
// kernel: tpu_custom_call.1
$region0: #{tpu_custom_call.1}
  #allocation0 [shape = 'u32[]', space=smem, size = 0x4, offset = 0x4, fixed_abs, tag = 'smem constant byte address 0x4 - core index']
  #allocation1 [shape = 'u32[144,128]{1,0:T(1,128)}', space=vmem, size = 0x12000, scoped, tag = 'internal scratch']
  %s0 = inlined_call_operand.hbm [shape: f32[8,4,256], index: 0, kind: input, shape index: {}]
  %s1 = inlined_call_operand.vmem [shape: f32[8,4], index: 1, kind: output, shape index: {}]
  %s2 = sld [smem:[#allocation0]]
  $region18: #{tpu_custom_call.1} parent=0
    _
  %s4 = ssub.s32 1, %s2
  %s5 = scalar_select 0, %s4, %s2
  $region1: #{tpu_custom_call.1} parent=0
    #allocation2 [shape = 'u8[32768]{0}', space=vmem, size = 0x8000, scoped, tag = 'input window, operand 0, single buffered']
    #allocation3 [shape = 's32[1]{0}', space=sflag, size = 0x4, scoped, tag = 'scoped memory for tpu_custom_call.1']
    %6 = vsyncpa [#allocation3], 0
    // Predicated region
    $region2: #{tpu_custom_call.1} parent=1 // pred_check
      _
    $region3: #{tpu_custom_call.1} parent=1 // pred_check_branch
      %8 = sbr.rel (0) target = $region5
    $region4: #{tpu_custom_call.1} parent=1 // pred_region
      %s10 = ssub.s32 1024, 1024
      %11 = vsyncadd [#allocation3], %s10
      %s12 = sshll.u32 [#allocation2], 4
      %s13 = int_to_ptr.vmem [resolvable:$true] %s12
      %18 = dma.hbm_to_vmem [thread:$0]  %s0, 1024, %s13, [#allocation3], 128, 128, 8
    $region5: #{tpu_custom_call.1} parent=1 // pred_fallthru
      _
    // Predicated region
    $region6: #{tpu_custom_call.1} parent=1 // pred_check
      _
    $region7: #{tpu_custom_call.1} parent=1 // pred_check_branch
      %20 = sbr.rel (0) target = $region9
    $region8: #{tpu_custom_call.1} parent=1 // pred_region
      %21 = dma.done [#allocation3], 1024
    $region9: #{tpu_custom_call.1} parent=1 // pred_fallthru
      _
    %v22 = vld [vmem:[#allocation2] sm:$0xff]
    %v23 = vld [vmem:[#allocation2 + $0x8] sm:$0xff]
    %v24 = vld [vmem:[#allocation2 + $0x10] sm:$0xff]
    %v25 = vld [vmem:[#allocation2 + $0x18] sm:$0xff]
    %v26 = vld [vmem:[#allocation2 + $0x20] sm:$0xff]
    %v27 = vld [vmem:[#allocation2 + $0x28] sm:$0xff]
    %v28 = vld [vmem:[#allocation2 + $0x30] sm:$0xff]
    %v29 = vld [vmem:[#allocation2 + $0x38] sm:$0xff]
    %v38 = vcombine.high %v22, %v22
    %v39 = vcombine.high %v23, %v23
    %v40 = vcombine.high %v24, %v24
    %v41 = vcombine.high %v25, %v25
    %v42 = vcombine.high %v26, %v26
    %v43 = vcombine.high %v27, %v27
    %v44 = vcombine.high %v28, %v28
    %v45 = vcombine.high %v29, %v29
    %vm54 = vcmask 1043456
    %v55 = vsel %vm54, %v22, 0.0
    %v56 = vsel %vm54, %v38, 0.0
    %v57 = vadd.f32 %v55, %v56
    %58 = vadd.xlane.f32.xlu0 %v57
    %v59 = vpop.xlane.xlu0 %58
    %v60 = vsel %vm54, %v23, 0.0
    %v61 = vsel %vm54, %v39, 0.0
    %v62 = vadd.f32 %v60, %v61
    %63 = vadd.xlane.f32.xlu0 %v62
    %v64 = vpop.xlane.xlu0 %63
    %v65 = vsel %vm54, %v24, 0.0
    %v66 = vsel %vm54, %v40, 0.0
    %v67 = vadd.f32 %v65, %v66
    %68 = vadd.xlane.f32.xlu0 %v67
    %v69 = vpop.xlane.xlu0 %68
    %v70 = vsel %vm54, %v25, 0.0
    %v71 = vsel %vm54, %v41, 0.0
    %v72 = vadd.f32 %v70, %v71
    %73 = vadd.xlane.f32.xlu0 %v72
    %v74 = vpop.xlane.xlu0 %73
    %v75 = vsel %vm54, %v26, 0.0
    %v76 = vsel %vm54, %v42, 0.0
    %v77 = vadd.f32 %v75, %v76
    %78 = vadd.xlane.f32.xlu0 %v77
    %v79 = vpop.xlane.xlu0 %78
    %v80 = vsel %vm54, %v27, 0.0
    %v81 = vsel %vm54, %v43, 0.0
    %v82 = vadd.f32 %v80, %v81
    %83 = vadd.xlane.f32.xlu0 %v82
    %v84 = vpop.xlane.xlu0 %83
    %v85 = vsel %vm54, %v28, 0.0
    %v86 = vsel %vm54, %v44, 0.0
    %v87 = vadd.f32 %v85, %v86
    %88 = vadd.xlane.f32.xlu0 %v87
    %v89 = vpop.xlane.xlu0 %88
    %v90 = vsel %vm54, %v29, 0.0
    %v91 = vsel %vm54, %v45, 0.0
    %v92 = vadd.f32 %v90, %v91
    %93 = vadd.xlane.f32.xlu0 %v92
    %v94 = vpop.xlane.xlu0 %93
    %v95 = vrcp.pop 256.0
    %v96 = vmul.f32 %v59, %v95
    %v97 = vmul.f32 %v64, %v95
    %v98 = vmul.f32 %v69, %v95
    %v99 = vmul.f32 %v74, %v95
    %v100 = vmul.f32 %v79, %v95
    %v101 = vmul.f32 %v84, %v95
    %v102 = vmul.f32 %v89, %v95
    %v103 = vmul.f32 %v94, %v95
    %v112 = vlaneseq
    %v113 = vand.u32 %v112, 127
    %v114 = vlaneseq
    %v115 = vshrl.u32 %v114, 7
    %v116 = vsub.s32 %v113, %v115
    %v117 = vrot.slane %v96, %v116
    %v118 = vlaneseq
    %v119 = vshrl.u32 %v118, 7
    %v120 = vsub.s32 %v113, %v119
    %v121 = vrot.slane %v97, %v120
    %v122 = vlaneseq
    %v123 = vshrl.u32 %v122, 7
    %v124 = vsub.s32 %v113, %v123
    %v125 = vrot.slane %v98, %v124
    %v126 = vlaneseq
    %v127 = vshrl.u32 %v126, 7
    %v128 = vsub.s32 %v113, %v127
    %v129 = vrot.slane %v99, %v128
    %v130 = vlaneseq
    %v131 = vshrl.u32 %v130, 7
    %v132 = vsub.s32 %v113, %v131
    %v133 = vrot.slane %v100, %v132
    %v134 = vlaneseq
    %v135 = vshrl.u32 %v134, 7
    %v136 = vsub.s32 %v113, %v135
    %v137 = vrot.slane %v101, %v136
    %v138 = vlaneseq
    %v139 = vshrl.u32 %v138, 7
    %v140 = vsub.s32 %v113, %v139
    %v141 = vrot.slane %v102, %v140
    %v142 = vlaneseq
    %v143 = vshrl.u32 %v142, 7
    %v144 = vsub.s32 %v113, %v143
    %v145 = vrot.slane %v103, %v144
    %vm146 = vcmask 1041409
    %v147 = vsel %vm146, %v121, %v117
    %vm148 = vcmask 1042434
    %v149 = vsel %vm148, %v125, %v147
    %vm150 = vcmask 1043459
    %v151 = vsel %vm150, %v129, %v149
    %vm152 = vcmask 1044484
    %v153 = vsel %vm152, %v133, %v151
    %vm154 = vcmask 1045509
    %v155 = vsel %vm154, %v137, %v153
    %vm156 = vcmask 1046534
    %v157 = vsel %vm156, %v141, %v155
    %vm158 = vcmask 1047559
    %v159 = vsel %vm158, %v145, %v157
    %vm161 = vcmask 31744
    %162 = vst.msk [vmem:[%s1] sm:$0xff] %vm161, %v159
    // Predicated region
    $region10: #{tpu_custom_call.1} parent=1 // pred_check
      _
    $region11: #{tpu_custom_call.1} parent=1 // pred_check_branch
      %164 = sbr.rel (0) target = $region13
    $region12: #{tpu_custom_call.1} parent=1 // pred_region
      _
    $region13: #{tpu_custom_call.1} parent=1 // pred_fallthru
      _
    // Predicated region
    $region14: #{tpu_custom_call.1} parent=1 // pred_check
      _
    $region15: #{tpu_custom_call.1} parent=1 // pred_check_branch
      %166 = sbr.rel (0) target = $region17
    $region16: #{tpu_custom_call.1} parent=1 // pred_region
      _
    $region17: #{tpu_custom_call.1} parent=1 // pred_fallthru
      _
    %167 = vsyncpa [#allocation3], 1

</llo_original>
